<compile_context>
chip_gen: v5e
topology: v5e:2x2
jax: 0.10.0
libtpu: 0.0.40
codegen_flags: <defaults>
</compile_context>

<pallas_src>
import math
import functools

import jax
import jax.numpy as jnp
from jax.experimental import pallas as pl
from jax.experimental.pallas import tpu as pltpu


# ----------------------------------------------------------------------------
# pe buffer construction (matches torch __init__ exactly)
# ----------------------------------------------------------------------------
def build_pe(d_model: int, max_len: int) -> jax.Array:
    position = jnp.arange(max_len, dtype=jnp.float32)[:, None]                  # (max_len, 1)
    div_term = jnp.exp(jnp.arange(0, d_model, 2, dtype=jnp.float32)
                       * (-math.log(10000.0) / d_model))                        # (d_model/2,)
    pe = jnp.zeros((max_len, 1, d_model), dtype=jnp.float32)
    pe = pe.at[:, 0, 0::2].set(jnp.sin(position * div_term))
    pe = pe.at[:, 0, 1::2].set(jnp.cos(position * div_term))
    return pe                                                                    # (max_len, 1, d_model)


# ----------------------------------------------------------------------------
# Pallas kernels (blocks are (TS, D): sublane = sequence rows, lane = d_model)
# ----------------------------------------------------------------------------
def _pe_add_kernel(x_ref, pe_ref, o_ref):
    # eval mode: dropout is identity -> just x + pe
    o_ref[...] = (x_ref[...] + pe_ref[...]).astype(o_ref.dtype)


def _pe_add_dropout_kernel(x_ref, pe_ref, u_ref, o_ref, *, keep_prob: float):
    # training mode: inverted dropout; u_ref holds uniform(0,1) randoms
    y = x_ref[...] + pe_ref[...]
    keep = u_ref[...] < jnp.float32(keep_prob)
    o_ref[...] = jnp.where(keep, y * (1.0 / keep_prob),
                           jnp.zeros_like(y)).astype(o_ref.dtype)


# ----------------------------------------------------------------------------
# Tile sizing (per-generation VMEM aware)
# ----------------------------------------------------------------------------
def _pick_tile_s(S: int, D: int, n_streams: int,
                 budget_bytes: int = 10 * 1024 * 1024) -> int:
    """Sequence-tile length: target ~512 sublane rows, bounded so double-buffered
    tiles (n_streams arrays of (TS, D) f32) stay under a conservative VMEM budget
    that fits even v5e's 16 MiB default scoped VMEM."""
    bytes_per_row = max(D, 1) * 4
    max_rows = max(8, int(budget_bytes // (2 * n_streams * bytes_per_row)))
    ts = min(S, 512, max_rows)
    if ts < S:
        ts = max(8, (ts // 8) * 8)   # keep (8, 128) block alignment when tiling
    return ts


# ----------------------------------------------------------------------------
# Wrapper
# ----------------------------------------------------------------------------
def positional_encoder(x: jax.Array, pe: jax.Array, *, training: bool = False,
                       rate: float = 0.1, seed: int = 0) -> jax.Array:
    """x: (S, B, D) float32;  pe: (max_len, 1, D) float32. Returns (S, B, D)."""
    S, B, D = x.shape
    dtype = x.dtype

    pe2d = pe[:S, 0, :].astype(dtype)              # (S, D)  — squeezed, lane-dense
    xt = jnp.transpose(x, (1, 0, 2))               # (B, S, D) — lane-dense blocks

    use_dropout = training and float(rate) > 0.0
    n_streams = 4 if use_dropout else 3            # x, pe, (u,), out
    ts = _pick_tile_s(S, D, n_streams)
    grid = (pl.cdiv(S, ts), B)                     # batch innermost -> pe tile reused

    x_spec = pl.BlockSpec((None, ts, D), lambda s, b: (b, s, 0))   # kernel sees (ts, D)
    pe_spec = pl.BlockSpec((ts, D), lambda s, b: (s, 0))
    o_spec = pl.BlockSpec((None, ts, D), lambda s, b: (b, s, 0))
    out_shape = jax.ShapeDtypeStruct((B, S, D), dtype)

    cparams = pltpu.CompilerParams(
        dimension_semantics=("parallel", "parallel"),
        vmem_limit_bytes=32 * 1024 * 1024,
    )
    eb = jnp.dtype(dtype).itemsize

    if not use_dropout:
        cost = pl.CostEstimate(flops=S * B * D, transcendentals=0,
                               bytes_accessed=(2 * S * B * D + S * D) * eb)
        out_t = pl.pallas_call(
            _pe_add_kernel,
            out_shape=out_shape,
            grid=grid,
            in_specs=[x_spec, pe_spec],
            out_specs=o_spec,
            input_output_aliases={0: 0},           # reuse x's (transposed) HBM buffer
            compiler_params=cparams,
            cost_estimate=cost,
        )(xt, pe2d)
    else:
        keep_prob = 1.0 - float(rate)
        u = jax.random.uniform(jax.random.PRNGKey(seed), (B, S, D),
                               dtype=jnp.float32)
        cost = pl.CostEstimate(flops=3 * S * B * D, transcendentals=0,
                               bytes_accessed=(3 * S * B * D + S * D) * eb)
        out_t = pl.pallas_call(
            functools.partial(_pe_add_dropout_kernel, keep_prob=keep_prob),
            out_shape=out_shape,
            grid=grid,
            in_specs=[x_spec, pe_spec, x_spec],    # u is blocked exactly like x
            out_specs=o_spec,
            input_output_aliases={0: 0},
            compiler_params=cparams,
            cost_estimate=cost,
        )(xt, pe2d, u)

    return jnp.transpose(out_t, (1, 0, 2))         # back to (S, B, D)


# ----------------------------------------------------------------------------
# Main
# ----------------------------------------------------------------------------
if __name__ == "__main__":
    d_model = 32
    max_len = 16
    seq = 8
    batch = 2

    key = jax.random.PRNGKey(0)
    x = jax.random.normal(key, (seq, batch, d_model), dtype=jnp.float32)
    pe = build_pe(d_model, max_len)

    # eval-mode forward (dropout == identity) — deterministic, checked vs reference
    out = jax.block_until_ready(positional_encoder(x, pe, training=False))
    ref = x + pe[:seq]
    assert out.shape == (seq, batch, d_model)
    assert jnp.allclose(out, ref, atol=1e-6, rtol=1e-6), "mismatch vs reference"

    # training-mode forward — every element must be 0 (dropped) or ref/keep_prob (kept)
    rate = 0.1
    out_tr = jax.block_until_ready(
        positional_encoder(x, pe, training=True, rate=rate, seed=1234))
    assert out_tr.shape == (seq, batch, d_model)
    scaled = ref / (1.0 - rate)
    ok = jnp.isclose(out_tr, 0.0, atol=1e-6) | jnp.isclose(out_tr, scaled, atol=1e-5)
    assert bool(jnp.all(ok)), "dropout output not in {0, (x+pe)/keep_prob}"

    print("KERNEL_OK")
</pallas_src>

<mosaic_0001>
module attributes {stable_mosaic.version = 11 : i64} {
  func.func @_pe_add_kernel(%arg0: i32, %arg1: i32, %arg2: memref<1x8x32xf32, #tpu.memory_space<vmem>>, %arg3: memref<8x32xf32, #tpu.memory_space<vmem>>, %arg4: memref<1x8x32xf32, #tpu.memory_space<vmem>>) attributes {dimension_semantics = [#tpu.dimension_semantics<parallel>, #tpu.dimension_semantics<parallel>], iteration_bounds = array<i64: 1, 2>, scalar_prefetch = 0 : i64, scratch_operands = 0 : i64, tpu.core_type = #tpu.core_type<tc>, window_params = [{transform_indices = @transform_0, window_bounds = array<i64: 1, 8, 32>}, {transform_indices = @transform_1, window_bounds = array<i64: 8, 32>}, {transform_indices = @transform_2, window_bounds = array<i64: 1, 8, 32>}]} {
    %c0 = arith.constant 0 : index
    %c0_0 = arith.constant 0 : index
    %c0_1 = arith.constant 0 : index
    %0 = vector.load %arg2[%c0, %c0_0, %c0_1] : memref<1x8x32xf32, #tpu.memory_space<vmem>>, vector<1x8x32xf32>
    %1 = vector.shape_cast %0 : vector<1x8x32xf32> to vector<8x32xf32>
    %c0_2 = arith.constant 0 : index
    %c0_3 = arith.constant 0 : index
    %2 = vector.load %arg3[%c0_2, %c0_3] : memref<8x32xf32, #tpu.memory_space<vmem>>, vector<8x32xf32>
    %3 = arith.addf %1, %2 : vector<8x32xf32>
    %c0_4 = arith.constant 0 : index
    %c0_5 = arith.constant 0 : index
    %c0_6 = arith.constant 0 : index
    %4 = vector.load %arg4[%c0_4, %c0_5, %c0_6] : memref<1x8x32xf32, #tpu.memory_space<vmem>>, vector<1x8x32xf32>
    %5 = vector.shape_cast %4 : vector<1x8x32xf32> to vector<8x32xf32>
    %6 = vector.shape_cast %3 : vector<8x32xf32> to vector<1x8x32xf32>
    tpu.vector_store %arg4[%c0_4, %c0_5, %c0_6], %6 {strides = array<i32>} : memref<1x8x32xf32, #tpu.memory_space<vmem>>, vector<1x8x32xf32>,
    return
  }
  func.func @transform_0(%arg0: i32, %arg1: i32) -> (i32, i32, i32) {
    %c0_i32 = arith.constant 0 : i32
    %c0_i32_0 = arith.constant 0 : i32
    return %arg1, %arg0, %c0_i32 : i32, i32, i32
  }
  func.func @transform_1(%arg0: i32, %arg1: i32) -> (i32, i32) {
    %c0_i32 = arith.constant 0 : i32
    %c0_i32_0 = arith.constant 0 : i32
    return %arg0, %c0_i32 : i32, i32
  }
  func.func @transform_2(%arg0: i32, %arg1: i32) -> (i32, i32, i32) {
    %c0_i32 = arith.constant 0 : i32
    %c0_i32_0 = arith.constant 0 : i32
    return %arg1, %arg0, %c0_i32 : i32, i32, i32
  }
}

</mosaic_0001>

<llo_original>
// kernel: tpu_custom_call.1
$region0: #{tpu_custom_call.1}
  #allocation0 [shape = 'u32[]', space=smem, size = 0x4, offset = 0x4, fixed_abs, tag = 'smem constant byte address 0x4 - core index']
  #allocation1 [shape = 'u32[72,128]{1,0:T(1,128)}', space=vmem, size = 0x9000, scoped, tag = 'internal scratch']
  %s0 = inlined_call_operand.hbm [shape: f32[2,8,32], index: 0, kind: input, shape index: {}, may-alias: {0,2}]
  %s1 = inlined_call_operand.vmem [shape: f32[8,32], index: 1, kind: input, shape index: {}]
  %s2 = inlined_call_operand.hbm [shape: f32[2,8,32], index: 2, kind: output, shape index: {}, may-alias: {0,2}]
  %s3 = sld [smem:[#allocation0]]
  $region45: #{tpu_custom_call.1} parent=0
    _
  %s5 = ssub.s32 1, %s3
  %s6 = scalar_select 0, %s5, %s3
  $region1: #{tpu_custom_call.1} parent=0
    #allocation2 [shape = 'u8[8192]{0}', space=vmem, size = 0x2000, scoped, tag = 'input window, operand 0']
    #allocation3 [shape = 's32[2]{0}', space=sflag, size = 0x8, scoped, tag = 'scoped memory for tpu_custom_call.1']
    #allocation4 [shape = 's32[2]{0}', space=sflag, size = 0x8, scoped, tag = 'scoped memory for tpu_custom_call.1']
    #allocation5 [shape = 'u8[8192]{0}', space=vmem, size = 0x2000, scoped, tag = 'output window, operand 0']
    %7 = vsyncpa [#allocation3], 0
    %s8 = scalar_lea.sflag [#allocation3], 1
    %9 = vsyncpa %s8, 0
    %10 = vsyncpa [#allocation4], 0
    %s11 = scalar_lea.sflag [#allocation4], 1
    %12 = vsyncpa %s11, 0
    loop: start=0, step=1, limit=4
    $region2: #{tpu_custom_call.1} parent=1 // loop_pre_header
      _
    $region3: #{tpu_custom_call.1} parent=1 // loop_header
      %s14 = sphi 0, %s18
      %p15 = scmp.ge.s32.totalorder %s14, 4
      %s21 = sphi 0, %s33
      %s22 = sphi 0, %s29
      %s23 = sphi 0, %s21
      %s24 = sphi 0, %s22
      %s25 = sphi 0, %s23
      %s26 = sphi 0, %s24
      %s38 = sphi 0, %s40
      %s41 = sphi 0, %s38
      %s42 = sphi 0, %s41
      %s58 = sphi 0, %s42
      %s64 = sphi 0, %s66
      %s67 = sphi 0, %s64
      %s68 = sphi 0, %s67
      %s84 = sphi 0, %s68
      %s92 = sphi 0, %s94
      %s95 = sphi 0, %s92
      %s96 = sphi 0, %s95
      %s112 = sphi 0, %s96
    $region4: #{tpu_custom_call.1} parent=1 // loop_header_branch
      %17 = sbr.rel (%p15) target = $region8
    $region5: #{tpu_custom_call.1} parent=1 // loop_body
      %s19 = ssub.s32 %s14, 1
      %s20 = ssub.s32 %s14, 2
      %s27 = sadd.s32 1, %s22
      %p28 = scmp.ge.s32.totalorder %s27, 2
      %s29 = scalar_select %p28, 0, %s27
      %s30 = sadd.s32 1, %s21
      %s31 = scalar_select %p28, %s30, %s21
      %p32 = scmp.ge.s32.totalorder %s31, 1
      %s33 = scalar_select %p32, 0, %s31
      %s34 = ssub.s32 %s22, %s29
      %s35 = ssub.s32 %s21, %s33
      %s36 = sor.u32 %s34, %s35
      %p37 = scmp.eq.s32.totalorder %s36, 0
      %s39 = sadd.s32 %s38, 1
      %s40 = scalar_select %p37, %s38, %s39
      %p43 = pneg %p37
      %p44 = scmp.eq.s32.totalorder %s14, 1
      %p45 = por %p43, %p44
      %p46 = scmp.ne.s32.totalorder %s38, %s41
      %p47 = scmp.eq.s32.totalorder %s14, 0
      %p48 = por %p46, %p47
      %p49 = scmp.ne.s32.totalorder %s38, %s41
      %p50 = scmp.eq.s32.totalorder %s19, 1
      %p51 = por %p49, %p50
      %p52 = scmp.ne.s32.totalorder %s41, %s42
      %p53 = scmp.eq.s32.totalorder %s19, 0
      %p54 = por %p52, %p53
      %p55 = scmp.ne.s32.totalorder %s41, %s42
      %p56 = scmp.eq.s32.totalorder %s20, 1
      %p57 = por %p55, %p56
      %p59 = scmp.ne.s32.totalorder %s42, %s58
      %p60 = scmp.eq.s32.totalorder %s20, 0
      %p61 = por %p59, %p60
      %s62 = ssub.s32 %s21, %s33
      %p63 = scmp.eq.s32.totalorder %s62, 0
      %s65 = sadd.s32 %s64, 1
      %s66 = scalar_select %p63, %s64, %s65
      %p69 = pneg %p63
      %p70 = scmp.eq.s32.totalorder %s14, 1
      %p71 = por %p69, %p70
      %p72 = scmp.ne.s32.totalorder %s64, %s67
      %p73 = scmp.eq.s32.totalorder %s14, 0
      %p74 = por %p72, %p73
      %p75 = scmp.ne.s32.totalorder %s64, %s67
      %p76 = scmp.eq.s32.totalorder %s19, 1
      %p77 = por %p75, %p76
      %p78 = scmp.ne.s32.totalorder %s67, %s68
      %p79 = scmp.eq.s32.totalorder %s19, 0
      %p80 = por %p78, %p79
      %p81 = scmp.ne.s32.totalorder %s67, %s68
      %p82 = scmp.eq.s32.totalorder %s20, 1
      %p83 = por %p81, %p82
      %p85 = scmp.ne.s32.totalorder %s68, %s84
      %p86 = scmp.eq.s32.totalorder %s20, 0
      %p87 = por %p85, %p86
      %s88 = ssub.s32 %s22, %s29
      %s89 = ssub.s32 %s21, %s33
      %s90 = sor.u32 %s88, %s89
      %p91 = scmp.eq.s32.totalorder %s90, 0
      %s93 = sadd.s32 %s92, 1
      %s94 = scalar_select %p91, %s92, %s93
      %p97 = pneg %p91
      %p98 = scmp.eq.s32.totalorder %s14, 1
      %p99 = por %p97, %p98
      %p100 = scmp.ne.s32.totalorder %s92, %s95
      %p101 = scmp.eq.s32.totalorder %s14, 0
      %p102 = por %p100, %p101
      %p103 = scmp.ne.s32.totalorder %s92, %s95
      %p104 = scmp.eq.s32.totalorder %s19, 1
      %p105 = por %p103, %p104
      %p106 = scmp.ne.s32.totalorder %s95, %s96
      %p107 = scmp.eq.s32.totalorder %s19, 0
      %p108 = por %p106, %p107
      %p109 = scmp.ne.s32.totalorder %s95, %s96
      %p110 = scmp.eq.s32.totalorder %s20, 1
      %p111 = por %p109, %p110
      %p113 = scmp.ne.s32.totalorder %s96, %s112
      %p114 = scmp.eq.s32.totalorder %s20, 0
      %p115 = por %p113, %p114
      %p116 = scmp.le.s32.totalorder 1, %s14
      %p117 = scmp.lt.s32.totalorder %s14, 3
      %p118 = pnand %p116, %p117
      %p119 = pneg %p118
      // Predicated region
      $region9: #{tpu_custom_call.1} parent=5 // pred_check
        _
      $region10: #{tpu_custom_call.1} parent=5 // pred_check_branch
        %121 = sbr.rel (%p118) target = $region12
      $region11: #{tpu_custom_call.1} parent=5 // pred_region
        %s122 = ssub.s32 %s14, 1
        // Predicated region
        $region13: #{tpu_custom_call.1} parent=11 // pred_check
          %p123 = pneg %p80
        $region14: #{tpu_custom_call.1} parent=11 // pred_check_branch
          %125 = sbr.rel (%p123) target = $region16
        $region15: #{tpu_custom_call.1} parent=11 // pred_region
          %p126 = scmp.lt.s32.totalorder %s23, 0
          %s127 = scalar_select %p126, %s23, 0
          %s128 = smul.addr %s127, 8
          %s129 = scalar_lea.vmem %s1, %s128
        $region16: #{tpu_custom_call.1} parent=11 // pred_fallthru
          _
      $region12: #{tpu_custom_call.1} parent=5 // pred_fallthru
        _
      %p130 = scmp.lt.s32.totalorder %s14, 2
      // Predicated region
      $region17: #{tpu_custom_call.1} parent=5 // pred_check
        %p131 = pneg %p130
      $region18: #{tpu_custom_call.1} parent=5 // pred_check_branch
        %133 = sbr.rel (%p131) target = $region20
      $region19: #{tpu_custom_call.1} parent=5 // pred_region
        // Predicated region
        $region21: #{tpu_custom_call.1} parent=19 // pred_check
          %p134 = pneg %p48
        $region22: #{tpu_custom_call.1} parent=19 // pred_check_branch
          %136 = sbr.rel (%p134) target = $region24
        $region23: #{tpu_custom_call.1} parent=19 // pred_region
          %s137 = sand.u32 %s38, 1
          %s138 = scalar_lea.sflag [#allocation3], %s137
          %s139 = sand.u32 %s38, 1
          %s140 = smul.addr %s139, 8
          %s141 = scalar_lea.vmem [#allocation2], %s140
          %143 = vsyncadd %s138, 0
          %s144 = sadd.s32 %s21, %s22
          %s145 = smul.addr %s144, 8
          %s146 = scalar_lea.hbm %s0, %s145
          %s148 = sshll.u32 %s146, 4
          %s149 = int_to_ptr.hbm [resolvable:$true] %s148
          %s150 = sshll.u32 %s141, 4
          %s151 = int_to_ptr.vmem [resolvable:$true] %s150
          %153 = dma.hbm_to_vmem [thread:$0]  %s149, 128, %s151, %s138
        $region24: #{tpu_custom_call.1} parent=19 // pred_fallthru
          _
      $region20: #{tpu_custom_call.1} parent=5 // pred_fallthru
        _
      %p154 = scmp.le.s32.totalorder 1, %s14
      %p155 = scmp.lt.s32.totalorder %s14, 3
      %p156 = pnand %p154, %p155
      %p157 = pneg %p156
      // Predicated region
      $region25: #{tpu_custom_call.1} parent=5 // pred_check
        _
      $region26: #{tpu_custom_call.1} parent=5 // pred_check_branch
        %159 = sbr.rel (%p156) target = $region28
      $region27: #{tpu_custom_call.1} parent=5 // pred_region
        %s160 = ssub.s32 %s14, 1
        %s161 = sand.u32 %s41, 1
        %s162 = scalar_lea.sflag [#allocation3], %s161
        %s163 = sand.u32 %s41, 1
        %s164 = smul.addr %s163, 8
        %s165 = scalar_lea.vmem [#allocation2], %s164
        // Predicated region
        $region29: #{tpu_custom_call.1} parent=27 // pred_check
          %p166 = pneg %p54
        $region30: #{tpu_custom_call.1} parent=27 // pred_check_branch
          %168 = sbr.rel (%p166) target = $region32
        $region31: #{tpu_custom_call.1} parent=27 // pred_region
          %170 = dma.done %s162, 128
        $region32: #{tpu_custom_call.1} parent=27 // pred_fallthru
          _
        %s171 = sand.u32 %s41, 1
        %s172 = scalar_lea.sflag [#allocation3], %s171
        %s173 = sand.u32 %s41, 1
        %s174 = smul.addr %s173, 8
        %s175 = scalar_lea.vmem [#allocation2], %s174
        %p176 = pneg %p54
        %p177 = pneg %p51
        %p178 = scmp.lt.s32.totalorder %s23, 0
        %s179 = scalar_select %p178, %s23, 0
        %s180 = smul.addr %s179, 8
        %s181 = scalar_lea.vmem %s1, %s180
        %p182 = pneg %p80
        %p183 = pneg %p77
        %p184 = pneg %p108
        %p185 = pneg %p105
        %s186 = sand.u32 %s95, 1
        %s187 = scalar_lea.sflag [#allocation4], %s186
        %s188 = sand.u32 %s95, 1
        %s189 = smul.addr %s188, 8
        %s190 = scalar_lea.vmem [#allocation5], %s189
        %p191 = scmp.lt.s32.totalorder %s23, 0
        %s192 = scalar_select %p191, %s23, 0
        %s193 = smul.addr %s192, 8
        %s194 = scalar_lea.vmem %s1, %s193
        %v195 = vld [vmem:[%s165] sm:$0xff]
        %v196 = vld [vmem:[%s194] sm:$0xff]
        %v197 = vadd.f32 %v195, %v196
        %vm198 = vcmask 261120
        %199 = vst.msk [vmem:[%s190] sm:$0xff] %vm198, %v197
        %s200 = sand.u32 %s95, 1
        %s201 = scalar_lea.sflag [#allocation4], %s200
        %s202 = sand.u32 %s95, 1
        %s203 = smul.addr %s202, 8
        %s204 = scalar_lea.vmem [#allocation5], %s203
        // Predicated region
        $region33: #{tpu_custom_call.1} parent=27 // pred_check
          %p205 = pneg %p105
        $region34: #{tpu_custom_call.1} parent=27 // pred_check_branch
          %207 = sbr.rel (%p205) target = $region36
        $region35: #{tpu_custom_call.1} parent=27 // pred_region
          %209 = vsyncadd %s201, 0
          %s210 = sadd.s32 %s23, %s24
          %s211 = smul.addr %s210, 8
          %s212 = scalar_lea.hbm %s2, %s211
          %s214 = sshll.u32 %s204, 4
          %s215 = int_to_ptr.vmem [resolvable:$true] %s214
          %s216 = sshll.u32 %s212, 4
          %s217 = int_to_ptr.hbm [resolvable:$true] %s216
          %219 = dma.vmem_to_hbm [thread:$0]  %s215, 128, %s217, %s201
        $region36: #{tpu_custom_call.1} parent=27 // pred_fallthru
          _
      $region28: #{tpu_custom_call.1} parent=5 // pred_fallthru
        _
      %p220 = scmp.le.s32.totalorder 2, %s14
      // Predicated region
      $region37: #{tpu_custom_call.1} parent=5 // pred_check
        %p221 = pneg %p220
      $region38: #{tpu_custom_call.1} parent=5 // pred_check_branch
        %223 = sbr.rel (%p221) target = $region40
      $region39: #{tpu_custom_call.1} parent=5 // pred_region
        %s224 = ssub.s32 %s14, 2
        // Predicated region
        $region41: #{tpu_custom_call.1} parent=39 // pred_check
          %p225 = pneg %p111
        $region42: #{tpu_custom_call.1} parent=39 // pred_check_branch
          %227 = sbr.rel (%p225) target = $region44
        $region43: #{tpu_custom_call.1} parent=39 // pred_region
          %s228 = sand.u32 %s96, 1
          %s229 = scalar_lea.sflag [#allocation4], %s228
          %s230 = sand.u32 %s96, 1
          %s231 = smul.addr %s230, 8
          %s232 = scalar_lea.vmem [#allocation5], %s231
          %234 = dma.done %s229, 128
        $region44: #{tpu_custom_call.1} parent=39 // pred_fallthru
          _
      $region40: #{tpu_custom_call.1} parent=5 // pred_fallthru
        _
    $region6: #{tpu_custom_call.1} parent=1 // loop_footer
      %s18 = sadd.s32 1, %s14
    $region7: #{tpu_custom_call.1} parent=1 // loop_footer_branch
      %13 = sbr.rel target = $region3
    $region8: #{tpu_custom_call.1} parent=1 // loop_exit
      _
    %235 = vsyncpa [#allocation3], 1
    %s236 = scalar_lea.sflag [#allocation3], 1
    %237 = vsyncpa %s236, 1
    %238 = vsyncpa [#allocation4], 1
    %s239 = scalar_lea.sflag [#allocation4], 1
    %240 = vsyncpa %s239, 1

</llo_original>
